<compile_context>
chip_gen: v7x
topology: tpu7x:2x2x1
jax: 0.10.0
libtpu: 0.0.40
codegen_flags: <defaults>
</compile_context>

<pallas_src>
import functools

import jax
import jax.numpy as jnp
from jax.experimental import pallas as pl
from jax.experimental.pallas import tpu as pltpu


def _policy_kernel(x_ref, w1b_ref, w2b_ref, out_ref, *, S, H):
    # x_ref:   (TB, S)     batch tile of inputs
    # w1b_ref: (S+1, H)    fc1 weight (S, H) with bias packed as last row
    # w2b_ref: (H+1, A+1)  fused [mean | value] head weight with bias last row
    # out_ref: (TB, A+1)   fused [mean | value] output slab
    x = x_ref[...]

    w1 = w1b_ref[0:S, :]          # (S, H)   static slice -> no runtime cost
    b1 = w1b_ref[S:S + 1, :]      # (1, H)
    h = jnp.maximum(
        jnp.dot(x, w1, preferred_element_type=jnp.float32) + b1, 0.0)

    w2 = w2b_ref[0:H, :]          # (H, A+1)
    b2 = w2b_ref[H:H + 1, :]      # (1, A+1)
    out_ref[...] = jnp.dot(h, w2, preferred_element_type=jnp.float32) + b2


def policy_forward(x, packed, *, tb=512):
    """Returns (mean, sigma, value).

    (mean, sigma) are the parameters of the Normal distribution the torch
    module would construct; value is the critic head output.
    """
    w1b = packed["w1b"]           # (S+1, H)
    w2b = packed["w2b"]           # (H+1, A+1)
    B, S = x.shape
    H = w1b.shape[1]
    A1 = w2b.shape[1]
    A = A1 - 1

    # Batch tile: multiple of 8 sublanes; clamp to (padded) B for small batches.
    TB = min(tb, max(8, ((B + 7) // 8) * 8))
    B_pad = ((B + TB - 1) // TB) * TB
    if B_pad != B:
        x = jnp.pad(x, ((0, B_pad - B), (0, 0)))

    kernel = functools.partial(_policy_kernel, S=S, H=H)

    out = pl.pallas_call(
        kernel,
        out_shape=jax.ShapeDtypeStruct((B_pad, A1), jnp.float32),
        grid=(B_pad // TB,),
        in_specs=[
            pl.BlockSpec((TB, S), lambda i: (i, 0)),        # x tile per step
            pl.BlockSpec((S + 1, H), lambda i: (0, 0)),     # weights stay resident
            pl.BlockSpec((H + 1, A1), lambda i: (0, 0)),
        ],
        out_specs=pl.BlockSpec((TB, A1), lambda i: (i, 0)),
        compiler_params=pltpu.CompilerParams(
            dimension_semantics=("parallel",)),
    )(x, w1b, w2b)

    mean = out[:B, :A]
    value = out[:B, A:A1]
    # softplus(sigma) is data-independent: computed once in plain JAX, not in
    # the kernel (no per-call DMAs / EUP work for it).
    sigma = jax.nn.softplus(packed["sigma"])
    return mean, sigma, value


def init_params(key, state_space, action_space):
    """Mirrors Policy.init_weights(): weights ~ N(0,1), biases = 0, sigma = 10.
    torch Linear weights are (out, in); we store transposed (in, out)."""
    k1, k2, k3 = jax.random.split(key, 3)
    w1 = jax.random.normal(k1, (64, state_space), jnp.float32).T      # (S, 64)
    w2m = jax.random.normal(k2, (action_space, 64), jnp.float32).T    # (64, A)
    w2v = jax.random.normal(k3, (1, 64), jnp.float32).T               # (64, 1)
    return {
        "w1": w1,
        "b1": jnp.zeros((1, 64), jnp.float32),
        "w2m": w2m,
        "b2m": jnp.zeros((1, action_space), jnp.float32),
        "w2v": w2v,
        "b2v": jnp.zeros((1, 1), jnp.float32),
        "sigma": jnp.full((1, 1), 10.0, jnp.float32),
    }


def pack_params(params):
    """Pack params into the 3-buffer layout the kernel consumes."""
    w1b = jnp.concatenate([params["w1"], params["b1"]], axis=0)        # (S+1, 64)
    w2 = jnp.concatenate([params["w2m"], params["w2v"]], axis=1)       # (64, A+1)
    b2 = jnp.concatenate([params["b2m"], params["b2v"]], axis=1)       # (1, A+1)
    w2b = jnp.concatenate([w2, b2], axis=0)                            # (65, A+1)
    return {"w1b": w1b, "w2b": w2b, "sigma": params["sigma"]}


def _reference(x, params):
    h = jnp.maximum(x @ params["w1"] + params["b1"], 0.0)
    mean = h @ params["w2m"] + params["b2m"]
    value = h @ params["w2v"] + params["b2v"]
    sigma = jax.nn.softplus(params["sigma"])
    return mean, sigma, value


if __name__ == "__main__":
    key = jax.random.PRNGKey(0)
    state_space = 16
    action_space = 4

    kp, kx1, kx2 = jax.random.split(key, 3)
    params = init_params(kp, state_space, action_space)
    packed = pack_params(params)

    # Test 1: small batch, single grid step.
    batch = 8
    x = jax.random.normal(kx1, (batch, state_space), jnp.float32)
    mean, sigma, value = policy_forward(x, packed)
    jax.block_until_ready((mean, sigma, value))

    mean_ref, sigma_ref, value_ref = _reference(x, params)
    assert mean.shape == (batch, action_space)
    assert value.shape == (batch, 1)
    assert sigma.shape == (1, 1)
    assert jnp.allclose(mean, mean_ref, atol=1e-4, rtol=1e-4)
    assert jnp.allclose(value, value_ref, atol=1e-4, rtol=1e-4)
    assert jnp.allclose(sigma, sigma_ref, atol=1e-5, rtol=1e-5)

    # Test 2: ragged batch with small tile to exercise padding + multi-step grid.
    batch2 = 20
    x2 = jax.random.normal(kx2, (batch2, state_space), jnp.float32)
    mean2, sigma2, value2 = policy_forward(x2, packed, tb=8)
    jax.block_until_ready((mean2, sigma2, value2))

    mean2_ref, _, value2_ref = _reference(x2, params)
    assert mean2.shape == (batch2, action_space)
    assert value2.shape == (batch2, 1)
    assert jnp.allclose(mean2, mean2_ref, atol=1e-4, rtol=1e-4)
    assert jnp.allclose(value2, value2_ref, atol=1e-4, rtol=1e-4)

    print("KERNEL_OK")
</pallas_src>

<mosaic_0001>
module attributes {stable_mosaic.version = 11 : i64} {
  func.func @_policy_kernel(%arg0: i32, %arg1: memref<8x16xf32, #tpu.memory_space<vmem>>, %arg2: memref<17x64xf32, #tpu.memory_space<vmem>>, %arg3: memref<65x5xf32, #tpu.memory_space<vmem>>, %arg4: memref<8x5xf32, #tpu.memory_space<vmem>>) attributes {dimension_semantics = [#tpu.dimension_semantics<parallel>], iteration_bounds = array<i64: 1>, scalar_prefetch = 0 : i64, scratch_operands = 0 : i64, tpu.core_type = #tpu.core_type<tc>, window_params = [{transform_indices = @transform_0, window_bounds = array<i64: 8, 16>}, {pipeline_mode = #tpu.pipeline_mode<synchronous>, transform_indices = @transform_1, window_bounds = array<i64: 17, 64>}, {pipeline_mode = #tpu.pipeline_mode<synchronous>, transform_indices = @transform_2, window_bounds = array<i64: 65, 5>}, {transform_indices = @transform_3, window_bounds = array<i64: 8, 5>}]} {
    %c0 = arith.constant 0 : index
    %c0_0 = arith.constant 0 : index
    %0 = vector.load %arg1[%c0, %c0_0] : memref<8x16xf32, #tpu.memory_space<vmem>>, vector<8x16xf32>
    %c0_1 = arith.constant 0 : index
    %c0_2 = arith.constant 0 : index
    %1 = vector.load %arg2[%c0_1, %c0_2] : memref<17x64xf32, #tpu.memory_space<vmem>>, vector<16x64xf32>
    %c16 = arith.constant 16 : index
    %c0_3 = arith.constant 0 : index
    %2 = vector.load %arg2[%c16, %c0_3] : memref<17x64xf32, #tpu.memory_space<vmem>>, vector<1x64xf32>
    %cst = arith.constant dense<0.000000e+00> : vector<8x64xf32>
    %3 = tpu.matmul %0, %1, %cst {dimension_numbers = #tpu.dot_dimension_numbers<[1], [0], [0], [1], [0, 0, 1, 1], [], []>} : vector<8x16xf32>, vector<16x64xf32>, vector<8x64xf32> -> vector<8x64xf32>
    %4 = vector.broadcast %2 : vector<1x64xf32> to vector<8x64xf32>
    %5 = arith.addf %3, %4 : vector<8x64xf32>
    %cst_4 = arith.constant 0.000000e+00 : f32
    %6 = vector.broadcast %cst_4 : f32 to vector<8x64xf32>
    %7 = arith.maximumf %5, %6 : vector<8x64xf32>
    %c0_5 = arith.constant 0 : index
    %c0_6 = arith.constant 0 : index
    %8 = vector.load %arg3[%c0_5, %c0_6] : memref<65x5xf32, #tpu.memory_space<vmem>>, vector<64x5xf32>
    %c64 = arith.constant 64 : index
    %c0_7 = arith.constant 0 : index
    %9 = vector.load %arg3[%c64, %c0_7] : memref<65x5xf32, #tpu.memory_space<vmem>>, vector<1x5xf32>
    %cst_8 = arith.constant dense<0.000000e+00> : vector<8x5xf32>
    %10 = tpu.matmul %7, %8, %cst_8 {dimension_numbers = #tpu.dot_dimension_numbers<[1], [0], [0], [1], [0, 0, 1, 1], [], []>} : vector<8x64xf32>, vector<64x5xf32>, vector<8x5xf32> -> vector<8x5xf32>
    %11 = vector.broadcast %9 : vector<1x5xf32> to vector<8x5xf32>
    %12 = arith.addf %10, %11 : vector<8x5xf32>
    %c0_9 = arith.constant 0 : index
    %c0_10 = arith.constant 0 : index
    %13 = vector.load %arg4[%c0_9, %c0_10] : memref<8x5xf32, #tpu.memory_space<vmem>>, vector<8x5xf32>
    tpu.vector_store %arg4[%c0_9, %c0_10], %12 {strides = array<i32>} : memref<8x5xf32, #tpu.memory_space<vmem>>, vector<8x5xf32>,
    return
  }
  func.func @transform_0(%arg0: i32) -> (i32, i32) {
    %c0_i32 = arith.constant 0 : i32
    %c0_i32_0 = arith.constant 0 : i32
    return %arg0, %c0_i32 : i32, i32
  }
  func.func @transform_1(%arg0: i32) -> (i32, i32) {
    %c0_i32 = arith.constant 0 : i32
    %c0_i32_0 = arith.constant 0 : i32
    %c0_i32_1 = arith.constant 0 : i32
    return %c0_i32, %c0_i32_0 : i32, i32
  }
  func.func @transform_2(%arg0: i32) -> (i32, i32) {
    %c0_i32 = arith.constant 0 : i32
    %c0_i32_0 = arith.constant 0 : i32
    %c0_i32_1 = arith.constant 0 : i32
    return %c0_i32, %c0_i32_0 : i32, i32
  }
  func.func @transform_3(%arg0: i32) -> (i32, i32) {
    %c0_i32 = arith.constant 0 : i32
    %c0_i32_0 = arith.constant 0 : i32
    return %arg0, %c0_i32 : i32, i32
  }
}

</mosaic_0001>

<llo_original>
// kernel: tpu_custom_call.1
$region0: #{tpu_custom_call.1}
  #allocation0 [shape = 'u32[]', space=smem, size = 0x4, offset = 0x4, fixed_abs, tag = 'smem constant byte address 0x4 - core index']
  #allocation1 [shape = 'u32[144,128]{1,0:T(1,128)}', space=vmem, size = 0x12000, scoped, tag = 'internal scratch']
  %s0 = inlined_call_operand.vmem [shape: f32[8,16], index: 0, kind: input, shape index: {}]
  %s1 = inlined_call_operand.vmem [shape: f32[17,64], index: 1, kind: input, shape index: {}]
  %s2 = inlined_call_operand.vmem [shape: f32[65,5], index: 2, kind: input, shape index: {}]
  %s3 = inlined_call_operand.hbm [shape: f32[8,5], index: 3, kind: output, shape index: {}]
  %s4 = sld [smem:[#allocation0]]
  $region22: #{tpu_custom_call.1} parent=0
    _
  %s6 = ssub.s32 1, %s4
  %s7 = scalar_select 0, %s6, %s4
  $region1: #{tpu_custom_call.1} parent=0
    #allocation2 [shape = 'u8[4096]{0}', space=vmem, size = 0x1000, scoped, tag = 'output window, operand 0, single buffered']
    #allocation3 [shape = 's32[1]{0}', space=sflag, size = 0x4, scoped, tag = 'scoped memory for tpu_custom_call.1']
    %8 = vsyncpa [#allocation3], 0
    // Predicated region
    $region2: #{tpu_custom_call.1} parent=1 // pred_check
      _
    $region3: #{tpu_custom_call.1} parent=1 // pred_check_branch
      %10 = sbr.rel (0) target = $region5
    $region4: #{tpu_custom_call.1} parent=1 // pred_region
      _
    $region5: #{tpu_custom_call.1} parent=1 // pred_fallthru
      _
    // Predicated region
    $region6: #{tpu_custom_call.1} parent=1 // pred_check
      _
    $region7: #{tpu_custom_call.1} parent=1 // pred_check_branch
      %12 = sbr.rel (0) target = $region9
    $region8: #{tpu_custom_call.1} parent=1 // pred_region
      _
    $region9: #{tpu_custom_call.1} parent=1 // pred_fallthru
      _
    // Predicated region
    $region10: #{tpu_custom_call.1} parent=1 // pred_check
      _
    $region11: #{tpu_custom_call.1} parent=1 // pred_check_branch
      %14 = sbr.rel (0) target = $region13
    $region12: #{tpu_custom_call.1} parent=1 // pred_region
      _
    $region13: #{tpu_custom_call.1} parent=1 // pred_fallthru
      _
    %v15 = vld [vmem:[%s0] sm:$0xff]
    %v16 = vld [vmem:[%s1] sm:$0xff]
    %v17 = vld [vmem:[%s1 + $0x8] sm:$0xff]
    %v18 = vld [vmem:[%s1 + $0x10] sm:$0x1]
    %v19 = vlaneseq
    %v20 = vshrl.u32 %v19, 7
    %v21 = vsub.s32 0, %v20
    %v22 = vrot.slane %v18, %v21
    %vm23 = vcmask 130048
    %v25 = vsel %vm23, %v15, 0
    %27 = vmatprep.subr.mxu0 0.0
    %28 = vmatpush1.msra.mxu0 %v16
    %29 = vmatprep.subr.mxu0 0.0
    %30 = vmatpush1.msra.mxu0 %v17
    %31 = vmatprep.subr.mxu0 0.0
    %32 = vmatpush1.msra.mxu0 0.0
    %33 = vmatprep.subr.mxu0 0.0
    %34 = vmatpush1.msra.mxu0 0.0
    %35 = vmatprep.subr.mxu0 0.0
    %36 = vmatpush1.msra.mxu0 0.0
    %37 = vmatprep.subr.mxu0 0.0
    %38 = vmatpush1.msra.mxu0 0.0
    %39 = vmatprep.subr.mxu0 0.0
    %40 = vmatpush1.msra.mxu0 0.0
    %41 = vmatprep.subr.mxu0 0.0
    %42 = vmatpush1.msra.mxu0 0.0
    %43 = vmatprep.subr.mxu0 0.0
    %44 = vmatpush1.msra.mxu0 0.0
    %45 = vmatprep.subr.mxu0 0.0
    %46 = vmatpush1.msra.mxu0 0.0
    %47 = vmatprep.subr.mxu0 0.0
    %48 = vmatpush1.msra.mxu0 0.0
    %49 = vmatprep.subr.mxu0 0.0
    %50 = vmatpush1.msra.mxu0 0.0
    %51 = vmatprep.subr.mxu0 0.0
    %52 = vmatpush1.msra.mxu0 0.0
    %53 = vmatprep.subr.mxu0 0.0
    %54 = vmatpush1.msra.mxu0 0.0
    %55 = vmatprep.subr.mxu0 0.0
    %56 = vmatpush1.msra.mxu0 0.0
    %57 = vmatprep.subr.mxu0 0.0
    %58 = vmatpush1.msra.mxu0 0.0
    %59 = vmatprep.subr.mxu0 0.0
    %60 = vmatpush1.msra.mxu0 0.0
    %61 = vmatprep.subr.mxu0 0.0
    %62 = vmatpush1.msra.mxu0 0.0
    %63 = vmatprep.subr.mxu0 0.0
    %64 = vmatpush1.msra.mxu0 0.0
    %65 = vmatprep.subr.mxu0 0.0
    %66 = vmatpush1.msra.mxu0 0.0
    %67 = vmatprep.subr.mxu0 0.0
    %68 = vmatpush1.msra.mxu0 0.0
    %69 = vmatprep.subr.mxu0 0.0
    %70 = vmatpush1.msra.mxu0 0.0
    %71 = vmatprep.subr.mxu0 0.0
    %72 = vmatpush1.msra.mxu0 0.0
    %73 = vmatprep.subr.mxu0 0.0
    %74 = vmatpush1.msra.mxu0 0.0
    %75 = vmatprep.subr.mxu0 0.0
    %76 = vmatpush1.msra.mxu0 0.0
    %77 = vmatprep.subr.mxu0 0.0
    %78 = vmatpush1.msra.mxu0 0.0
    %79 = vmatprep.subr.mxu0 0.0
    %80 = vmatpush1.msra.mxu0 0.0
    %81 = vmatprep.subr.mxu0 0.0
    %82 = vmatpush1.msra.mxu0 0.0
    %83 = vmatprep.subr.mxu0 0.0
    %84 = vmatpush1.msra.mxu0 0.0
    %85 = vmatprep.subr.mxu0 0.0
    %86 = vmatpush1.msra.mxu0 0.0
    %87 = vmatprep.subr.mxu0 0.0
    %88 = vmatpush1.msra.mxu0 0.0
    %89 = vmatprep.subr.mxu0 0.0
    %90 = vmatpush1.msra.mxu0 0.0
    %91 = vmatprep.mubr.f32.mxu0 0.0
    %92 = vmatmul.mubr.f32.gmra.mrb[0].mxu0 %v25
    %v93 = vpop.f32.mrb[0].mxu0
    %v94 = vadd.f32 %v22, %v93
    %v95 = vpop.f32.mrb[0].mxu0
    %96 = vdwg.mxu0
    %v97 = vmax.f32 %v94, 0.0
    %v98 = vld [vmem:[%s2] sm:$0xff]
    %v99 = vld [vmem:[%s2 + $0x8] sm:$0xff]
    %v100 = vld [vmem:[%s2 + $0x10] sm:$0xff]
    %v101 = vld [vmem:[%s2 + $0x18] sm:$0xff]
    %v102 = vld [vmem:[%s2 + $0x20] sm:$0xff]
    %v103 = vld [vmem:[%s2 + $0x28] sm:$0xff]
    %v104 = vld [vmem:[%s2 + $0x30] sm:$0xff]
    %v105 = vld [vmem:[%s2 + $0x38] sm:$0xff]
    %v106 = vld [vmem:[%s2 + $0x40] sm:$0x1]
    %v107 = vlaneseq
    %v108 = vshrl.u32 %v107, 7
    %v109 = vsub.s32 0, %v108
    %v110 = vrot.slane %v106, %v109
    %vm111 = vcmask 523264
    %v113 = vsel %vm111, %v97, 0
    %115 = vmatprep.subr.mxu0 0.0
    %116 = vmatpush1.msra.mxu0 %v98
    %117 = vmatprep.subr.mxu0 0.0
    %118 = vmatpush1.msra.mxu0 %v99
    %119 = vmatprep.subr.mxu0 0.0
    %120 = vmatpush1.msra.mxu0 %v100
    %121 = vmatprep.subr.mxu0 0.0
    %122 = vmatpush1.msra.mxu0 %v101
    %123 = vmatprep.subr.mxu0 0.0
    %124 = vmatpush1.msra.mxu0 %v102
    %125 = vmatprep.subr.mxu0 0.0
    %126 = vmatpush1.msra.mxu0 %v103
    %127 = vmatprep.subr.mxu0 0.0
    %128 = vmatpush1.msra.mxu0 %v104
    %129 = vmatprep.subr.mxu0 0.0
    %130 = vmatpush1.msra.mxu0 %v105
    %131 = vmatprep.subr.mxu0 0.0
    %132 = vmatpush1.msra.mxu0 0.0
    %133 = vmatprep.subr.mxu0 0.0
    %134 = vmatpush1.msra.mxu0 0.0
    %135 = vmatprep.subr.mxu0 0.0
    %136 = vmatpush1.msra.mxu0 0.0
    %137 = vmatprep.subr.mxu0 0.0
    %138 = vmatpush1.msra.mxu0 0.0
    %139 = vmatprep.subr.mxu0 0.0
    %140 = vmatpush1.msra.mxu0 0.0
    %141 = vmatprep.subr.mxu0 0.0
    %142 = vmatpush1.msra.mxu0 0.0
    %143 = vmatprep.subr.mxu0 0.0
    %144 = vmatpush1.msra.mxu0 0.0
    %145 = vmatprep.subr.mxu0 0.0
    %146 = vmatpush1.msra.mxu0 0.0
    %147 = vmatprep.subr.mxu0 0.0
    %148 = vmatpush1.msra.mxu0 0.0
    %149 = vmatprep.subr.mxu0 0.0
    %150 = vmatpush1.msra.mxu0 0.0
    %151 = vmatprep.subr.mxu0 0.0
    %152 = vmatpush1.msra.mxu0 0.0
    %153 = vmatprep.subr.mxu0 0.0
    %154 = vmatpush1.msra.mxu0 0.0
    %155 = vmatprep.subr.mxu0 0.0
    %156 = vmatpush1.msra.mxu0 0.0
    %157 = vmatprep.subr.mxu0 0.0
    %158 = vmatpush1.msra.mxu0 0.0
    %159 = vmatprep.subr.mxu0 0.0
    %160 = vmatpush1.msra.mxu0 0.0
    %161 = vmatprep.subr.mxu0 0.0
    %162 = vmatpush1.msra.mxu0 0.0
    %163 = vmatprep.subr.mxu0 0.0
    %164 = vmatpush1.msra.mxu0 0.0
    %165 = vmatprep.subr.mxu0 0.0
    %166 = vmatpush1.msra.mxu0 0.0
    %167 = vmatprep.subr.mxu0 0.0
    %168 = vmatpush1.msra.mxu0 0.0
    %169 = vmatprep.subr.mxu0 0.0
    %170 = vmatpush1.msra.mxu0 0.0
    %171 = vmatprep.subr.mxu0 0.0
    %172 = vmatpush1.msra.mxu0 0.0
    %173 = vmatprep.subr.mxu0 0.0
    %174 = vmatpush1.msra.mxu0 0.0
    %175 = vmatprep.subr.mxu0 0.0
    %176 = vmatpush1.msra.mxu0 0.0
    %177 = vmatprep.subr.mxu0 0.0
    %178 = vmatpush1.msra.mxu0 0.0
    %179 = vmatprep.mubr.f32.mxu0 0.0
    %180 = vmatmul.mubr.f32.gmra.mrb[0].mxu0 %v113
    %v181 = vpop.f32.mrb[0].mxu0
    %v182 = vadd.f32 %v110, %v181
    %v183 = vpop.f32.mrb[0].mxu0
    %184 = vdwg.mxu0
    %vm185 = vcmask 39936
    %186 = vst.msk [vmem:[#allocation2] sm:$0xff] %vm185, %v182
    // Predicated region
    $region14: #{tpu_custom_call.1} parent=1 // pred_check
      _
    $region15: #{tpu_custom_call.1} parent=1 // pred_check_branch
      %188 = sbr.rel (0) target = $region17
    $region16: #{tpu_custom_call.1} parent=1 // pred_region
      %s190 = ssub.s32 128, 128
      %191 = vsyncadd [#allocation3], %s190
      %s193 = sshll.u32 [#allocation2], 4
      %s194 = int_to_ptr.vmem [resolvable:$true] %s193
      %196 = dma.vmem_to_hbm [thread:$0]  %s194, 128, %s3, [#allocation3]
    $region17: #{tpu_custom_call.1} parent=1 // pred_fallthru
      _
    // Predicated region
    $region18: #{tpu_custom_call.1} parent=1 // pred_check
      _
    $region19: #{tpu_custom_call.1} parent=1 // pred_check_branch
      %198 = sbr.rel (0) target = $region21
    $region20: #{tpu_custom_call.1} parent=1 // pred_region
      %199 = dma.done [#allocation3], 128
    $region21: #{tpu_custom_call.1} parent=1 // pred_fallthru
      _
    %200 = vsyncpa [#allocation3], 1

</llo_original>
